<compile_context>
chip_gen: v5e
topology: v5e:2x2
jax: 0.10.0
libtpu: 0.0.40
codegen_flags: <defaults>
</compile_context>

<pallas_src>
import functools
import math

import jax
import jax.numpy as jnp
from jax import lax
from jax.experimental import pallas as pl
from jax.experimental.pallas import tpu as pltpu

jax.config.update("jax_default_matmul_precision", "highest")

BN_EPS = 1e-5           # PyTorch BatchNorm1d eps
LN_EPS = 1e-5           # PyTorch LayerNorm eps
TABNET_EPS = 1e-15      # TabNet epsilon for the mask entropy term
_TARGET_TILE_BYTES = 4 << 20   # ~4 MiB input tile per grid step (HBM-roofline friendly)
_BISECT_ITERS = 30      # sparsemax threshold bisection iterations (exactness restored after)


# ---------------------------------------------------------------------------
# small helpers
# ---------------------------------------------------------------------------
def _check_vb(batch, vb):
    assert batch % vb == 0, (
        f"batch must be divisible by the virtual batch size (batch={batch}, vb={vb})")
    # TODO(synk): ragged last chunk (torch.chunk semantics for B % vb != 0) is rejected
    # instead of emulated.
    assert vb % 8 == 0 or vb == batch, (
        f"virtual batch size must be a multiple of 8 (TPU sublane tiling) or the full "
        f"batch (vb={vb})")


def _chunks_per_block(num_chunks, chunk_bytes):
    """Largest divisor of num_chunks whose tile fits the byte target while keeping
    >= 2 grid steps (so the batch axis can shard across both TensorCores)."""
    limit = max(1, _TARGET_TILE_BYTES // max(chunk_bytes, 1))
    best = 1
    for c in range(1, num_chunks + 1):
        if num_chunks % c != 0 or c > limit:
            continue
        if num_chunks // c >= 2 or num_chunks == 1:
            best = c
    return best


def _sigmoid(x):
    return 1.0 / (1.0 + jnp.exp(-x))


# ---------------------------------------------------------------------------
# Kernel 1: Ghost BatchNorm (also used for the initial BatchNorm1d)
# ---------------------------------------------------------------------------
def _gbn_kernel(x_ref, gamma_ref, beta_ref, o_ref, *, vb, chunks):
    gamma = gamma_ref[...]
    beta = beta_ref[...]
    for g in range(chunks):                                    # static unroll over chunks
        xg = x_ref[pl.ds(g * vb, vb), :].astype(jnp.float32)     # (vb, D)
        mean = jnp.mean(xg, axis=0, keepdims=True)
        diff = xg - mean
        var = jnp.mean(diff * diff, axis=0, keepdims=True)        # biased variance
        scale = gamma * lax.rsqrt(var + BN_EPS)                    # (1, D)
        bias = beta - mean * scale
        o_ref[pl.ds(g * vb, vb), :] = (xg * scale + bias).astype(o_ref.dtype)


@functools.lru_cache(maxsize=None)
def _build_gbn(B, D, vb, dtype_name):
    dtype = jnp.dtype(dtype_name)
    num_chunks = B // vb
    itemsize = dtype.itemsize
    cpb = _chunks_per_block(num_chunks, vb * D * itemsize)
    rows = cpb * vb
    grid = num_chunks // cpb

    kernel = functools.partial(_gbn_kernel, vb=vb, chunks=cpb)
    cost = pl.CostEstimate(flops=8 * B * D, transcendentals=num_chunks * D,
                           bytes_accessed=(2 * B * D + 2 * D) * itemsize)
    call = pl.pallas_call(
        kernel,
        out_shape=jax.ShapeDtypeStruct((B, D), dtype),
        grid_spec=pltpu.PrefetchScalarGridSpec(
            num_scalar_prefetch=0,
            grid=(grid,),
            in_specs=[
                pl.BlockSpec((rows, D), lambda i: (i, 0)),
                pl.BlockSpec((1, D), lambda i: (0, 0)),
                pl.BlockSpec((1, D), lambda i: (0, 0)),
            ],
            out_specs=pl.BlockSpec((rows, D), lambda i: (i, 0)),
        ),
        compiler_params=pltpu.CompilerParams(dimension_semantics=("parallel",)),
        cost_estimate=cost,
    )
    return jax.jit(call)


def gbn(x, gamma, beta, vb):
    """Ghost BatchNorm, training-mode statistics. x: (B, D)."""
    B, D = x.shape
    vb = min(vb, B)
    _check_vb(B, vb)
    fn = _build_gbn(B, D, vb, jnp.dtype(x.dtype).name)
    return fn(x, gamma.reshape(1, D).astype(jnp.float32),
              beta.reshape(1, D).astype(jnp.float32))


# ---------------------------------------------------------------------------
# Kernel 2: fused Linear -> GBN -> GLU  (GLU_Layer)
# ---------------------------------------------------------------------------
def _glu_layer_kernel(x_ref, w_ref, gamma_ref, beta_ref, o_ref, *, vb, chunks, out_dim):
    x = x_ref[...].astype(jnp.float32)                 # (rows, in_dim)
    w = w_ref[...].astype(jnp.float32)                 # (in_dim, 2*out_dim)
    z = jnp.dot(x, w, preferred_element_type=jnp.float32)    # MXU
    gamma = gamma_ref[...]
    beta = beta_ref[...]
    for g in range(chunks):                            # per-virtual-batch statistics
        zg = z[g * vb:(g + 1) * vb, :]
        mean = jnp.mean(zg, axis=0, keepdims=True)
        diff = zg - mean
        var = jnp.mean(diff * diff, axis=0, keepdims=True)
        scale = gamma * lax.rsqrt(var + BN_EPS)
        bias = beta - mean * scale
        y = zg * scale + bias
        # TODO(synk): for production sizes with n_d+n_a < 128, pack chunk outputs along
        # the lane axis (or pad to 128 lanes) to avoid masked vst on the store side.
        out = y[:, :out_dim] * _sigmoid(y[:, out_dim:])
        o_ref[pl.ds(g * vb, vb), :] = out.astype(o_ref.dtype)


@functools.lru_cache(maxsize=None)
def _build_glu(B, in_dim, two_out, vb, dtype_name):
    dtype = jnp.dtype(dtype_name)
    out_dim = two_out // 2
    num_chunks = B // vb
    itemsize = dtype.itemsize
    cpb = _chunks_per_block(num_chunks, vb * max(in_dim, two_out) * itemsize)
    rows = cpb * vb
    grid = num_chunks // cpb

    kernel = functools.partial(_glu_layer_kernel, vb=vb, chunks=cpb, out_dim=out_dim)
    cost = pl.CostEstimate(
        flops=2 * B * in_dim * two_out + 10 * B * two_out,
        transcendentals=B * out_dim,
        bytes_accessed=(B * in_dim + in_dim * two_out + B * out_dim + 2 * two_out) * itemsize)
    call = pl.pallas_call(
        kernel,
        out_shape=jax.ShapeDtypeStruct((B, out_dim), dtype),
        grid_spec=pltpu.PrefetchScalarGridSpec(
            num_scalar_prefetch=0,
            grid=(grid,),
            in_specs=[
                pl.BlockSpec((rows, in_dim), lambda i: (i, 0)),
                pl.BlockSpec((in_dim, two_out), lambda i: (0, 0)),
                pl.BlockSpec((1, two_out), lambda i: (0, 0)),
                pl.BlockSpec((1, two_out), lambda i: (0, 0)),
            ],
            out_specs=pl.BlockSpec((rows, out_dim), lambda i: (i, 0)),
        ),
        compiler_params=pltpu.CompilerParams(dimension_semantics=("parallel",)),
        cost_estimate=cost,
    )
    return jax.jit(call)


def glu_layer(x, w, gamma, beta, vb):
    """Fused Linear(no bias) -> GBN -> GLU.  x: (B, in_dim), w: (in_dim, 2*out_dim)."""
    B, in_dim = x.shape
    two_out = w.shape[1]
    vb = min(vb, B)
    _check_vb(B, vb)
    fn = _build_glu(B, in_dim, two_out, vb, jnp.dtype(x.dtype).name)
    return fn(x, w.astype(jnp.float32),
              gamma.reshape(1, two_out).astype(jnp.float32),
              beta.reshape(1, two_out).astype(jnp.float32))


# ---------------------------------------------------------------------------
# Kernel 3: fused Linear -> GBN -> *prior -> sparsemax  (AttentiveTransformer)
# ---------------------------------------------------------------------------
def _attentive_kernel(att_ref, w_ref, gamma_ref, beta_ref, prior_ref, o_ref, *, vb, chunks):
    x = att_ref[...].astype(jnp.float32)
    w = w_ref[...].astype(jnp.float32)
    z = jnp.dot(x, w, preferred_element_type=jnp.float32)    # (rows, att_dim)
    gamma = gamma_ref[...]
    beta = beta_ref[...]
    prior = prior_ref[...].astype(jnp.float32)
    for g in range(chunks):
        zg = z[g * vb:(g + 1) * vb, :]
        mean = jnp.mean(zg, axis=0, keepdims=True)
        diff = zg - mean
        var = jnp.mean(diff * diff, axis=0, keepdims=True)
        scale = gamma * lax.rsqrt(var + BN_EPS)
        bias = beta - mean * scale
        y = (zg * scale + bias) * prior[g * vb:(g + 1) * vb, :]

        # sparsemax along the feature axis, sort-free: shift by the row max, bisect for
        # the threshold tau in [-1, 0], then refine tau exactly on the recovered support
        # (identical to the sort-based formula for generic inputs).
        y0 = y - jnp.max(y, axis=-1, keepdims=True)
        lo = jnp.full((vb, 1), -1.0, jnp.float32)
        hi = jnp.zeros((vb, 1), jnp.float32)

        def body(_, carry, y0=y0):
            lo_, hi_ = carry
            mid = 0.5 * (lo_ + hi_)
            mass = jnp.sum(jnp.maximum(y0 - mid, 0.0), axis=-1, keepdims=True)
            take = mass >= 1.0
            return jnp.where(take, mid, lo_), jnp.where(take, hi_, mid)

        lo, hi = lax.fori_loop(0, _BISECT_ITERS, body, (lo, hi))
        tau_b = 0.5 * (lo + hi)
        supp = (y0 > tau_b).astype(jnp.float32)
        k = jnp.sum(supp, axis=-1, keepdims=True)
        tau = (jnp.sum(y0 * supp, axis=-1, keepdims=True) - 1.0) / k
        o_ref[pl.ds(g * vb, vb), :] = jnp.maximum(y0 - tau, 0.0).astype(o_ref.dtype)


@functools.lru_cache(maxsize=None)
def _build_attentive(B, n_a, att_dim, vb, dtype_name):
    dtype = jnp.dtype(dtype_name)
    num_chunks = B // vb
    itemsize = dtype.itemsize
    cpb = _chunks_per_block(num_chunks, vb * max(n_a, att_dim) * itemsize)
    rows = cpb * vb
    grid = num_chunks // cpb

    kernel = functools.partial(_attentive_kernel, vb=vb, chunks=cpb)
    cost = pl.CostEstimate(
        flops=2 * B * n_a * att_dim + (3 * _BISECT_ITERS + 16) * B * att_dim,
        transcendentals=0,
        bytes_accessed=(B * n_a + n_a * att_dim + 2 * B * att_dim + 2 * att_dim) * itemsize)
    call = pl.pallas_call(
        kernel,
        out_shape=jax.ShapeDtypeStruct((B, att_dim), dtype),
        grid_spec=pltpu.PrefetchScalarGridSpec(
            num_scalar_prefetch=0,
            grid=(grid,),
            in_specs=[
                pl.BlockSpec((rows, n_a), lambda i: (i, 0)),
                pl.BlockSpec((n_a, att_dim), lambda i: (0, 0)),
                pl.BlockSpec((1, att_dim), lambda i: (0, 0)),
                pl.BlockSpec((1, att_dim), lambda i: (0, 0)),
                pl.BlockSpec((rows, att_dim), lambda i: (i, 0)),
            ],
            out_specs=pl.BlockSpec((rows, att_dim), lambda i: (i, 0)),
        ),
        compiler_params=pltpu.CompilerParams(dimension_semantics=("parallel",)),
        cost_estimate=cost,
    )
    return jax.jit(call)


def attentive_transformer(att, w, gamma, beta, prior, vb):
    """Fused Linear -> GBN -> *prior -> sparsemax.  att: (B, n_a), w: (n_a, att_dim)."""
    B, n_a = att.shape
    att_dim = w.shape[1]
    vb = min(vb, B)
    _check_vb(B, vb)
    fn = _build_attentive(B, n_a, att_dim, vb, jnp.dtype(att.dtype).name)
    return fn(att, w.astype(jnp.float32),
              gamma.reshape(1, att_dim).astype(jnp.float32),
              beta.reshape(1, att_dim).astype(jnp.float32),
              prior.astype(jnp.float32))


# ---------------------------------------------------------------------------
# Pure-JAX references for the three kernels (used for correctness checking)
# ---------------------------------------------------------------------------
def _gbn_ref(x, gamma, beta, vb):
    B, D = x.shape
    vb = min(vb, B)
    xr = x.astype(jnp.float32).reshape(B // vb, vb, D)
    mean = jnp.mean(xr, axis=1, keepdims=True)
    var = jnp.mean((xr - mean) ** 2, axis=1, keepdims=True)
    y = (xr - mean) * lax.rsqrt(var + BN_EPS) * gamma.reshape(1, 1, D) + beta.reshape(1, 1, D)
    return y.reshape(B, D).astype(x.dtype)


def _glu_layer_ref(x, w, gamma, beta, vb):
    out_dim = w.shape[1] // 2
    z = jnp.dot(x.astype(jnp.float32), w.astype(jnp.float32))
    y = _gbn_ref(z, gamma, beta, vb)
    return y[:, :out_dim] * _sigmoid(y[:, out_dim:])


def _sparsemax_ref(z):
    d = z.shape[-1]
    z = z - jnp.max(z, axis=-1, keepdims=True)
    z_srt = -jnp.sort(-z, axis=-1)                       # descending
    cumsum = jnp.cumsum(z_srt, axis=-1) - 1.0
    rhos = jnp.arange(1, d + 1, dtype=z.dtype)
    support = rhos * z_srt > cumsum
    k = jnp.sum(support, axis=-1, keepdims=True).astype(jnp.int32)
    tau = jnp.take_along_axis(cumsum, k - 1, axis=-1) / k.astype(z.dtype)
    return jnp.maximum(z - tau, 0.0)


def _attentive_ref(att, w, gamma, beta, prior, vb):
    z = jnp.dot(att.astype(jnp.float32), w.astype(jnp.float32))
    y = _gbn_ref(z, gamma, beta, vb) * prior
    return _sparsemax_ref(y)


# ---------------------------------------------------------------------------
# Plain-JAX glue shared by both paths (transformer prologue, blocks, model)
# ---------------------------------------------------------------------------
def _layer_norm(x, g, b):
    mean = jnp.mean(x, axis=-1, keepdims=True)
    var = jnp.mean((x - mean) ** 2, axis=-1, keepdims=True)
    return (x - mean) * lax.rsqrt(var + LN_EPS) * g + b


def _transformer_encoder_layer(p, x):
    """nn.TransformerEncoderLayer(d_model=input_dim, nhead=1), post-norm; the PyTorch
    forward feeds a sequence of length B with batch 1 (x.unsqueeze(1)).
    TODO(synk): dropout (p=0.1) is treated as identity (inference-mode); stochastic
    dropout cannot be matched deterministically."""
    E = x.shape[-1]
    q = x @ p['wq'] + p['bq']
    k = x @ p['wk'] + p['bk']
    v = x @ p['wv'] + p['bv']
    attn = jax.nn.softmax((q @ k.T) / math.sqrt(E), axis=-1)
    sa = (attn @ v) @ p['wo'] + p['bo']
    x = _layer_norm(x + sa, p['ln1_g'], p['ln1_b'])
    ff = jax.nn.relu(x @ p['ff_w1'] + p['ff_b1']) @ p['ff_w2'] + p['ff_b2']
    return _layer_norm(x + ff, p['ln2_g'], p['ln2_b'])


def _feat_transformer(params, x, vb, glu_fn):
    """GLU_Block(shared, first=True) followed by GLU_Block(independent, first=False)."""
    scale = jnp.float32(math.sqrt(0.5))
    shared = params['shared']
    x = glu_fn(x, shared[0]['w'], shared[0]['g'], shared[0]['b'], vb)   # first layer: no residual
    for lp in shared[1:]:
        x = (x + glu_fn(x, lp['w'], lp['g'], lp['b'], vb)) * scale
    for lp in params['spec']:
        x = (x + glu_fn(x, lp['w'], lp['g'], lp['b'], vb)) * scale
    return x


def tabnet_no_embeddings_forward(params, x, cfg, *, use_pallas=True):
    gbn_fn = gbn if use_pallas else _gbn_ref
    glu_fn = glu_layer if use_pallas else _glu_layer_ref
    att_fn = attentive_transformer if use_pallas else _attentive_ref

    n_d = cfg['n_d']
    vb = cfg['virtual_batch_size']
    gamma_relax = cfg['gamma']
    B = x.shape[0]

    # --- TabNetEncoder.forward ---
    x = _transformer_encoder_layer(params['enc'], x)        # unsqueeze(1)/Encoder/squeeze(1)
    x = gbn_fn(x, params['bn_g'], params['bn_b'], B)          # initial BatchNorm1d (batch stats)
    prior = jnp.ones((B, cfg['attention_dim']), jnp.float32)
    att = _feat_transformer(params['initial_splitter'], x, vb, glu_fn)[:, n_d:]

    m_loss = 0.0
    steps_output = []
    for sp in params['steps']:
        M = att_fn(att, sp['att_w'], sp['att_g'], sp['att_b'], prior, vb)
        m_loss = m_loss + jnp.mean(jnp.sum(M * jnp.log(M + TABNET_EPS), axis=1))
        prior = (gamma_relax - M) * prior
        masked_x = M * x                                   # group_attention_matrix = identity
        out = _feat_transformer(sp['feat'], masked_x, vb, glu_fn)
        steps_output.append(jax.nn.relu(out[:, :n_d]))
        att = out[:, n_d:]
    m_loss = m_loss / cfg['n_steps']                        # computed (and discarded) as in torch

    # --- TabNetNoEmbeddings.forward ---
    res = jnp.sum(jnp.stack(steps_output, axis=0), axis=0)
    return res @ params['final_w']


# ---------------------------------------------------------------------------
# Deterministic synthetic parameters
# ---------------------------------------------------------------------------
def _init_params(key, cfg):
    input_dim = cfg['input_dim']
    n_d, n_a = cfg['n_d'], cfg['n_a']
    nd_na = n_d + n_a
    two = 2 * nd_na
    att_dim = cfg['attention_dim']
    dff = cfg['dim_feedforward']

    keys = iter(jax.random.split(key, 128))

    def dense(in_dim, out_dim):
        # stored pre-transposed as (in, out) so kernels compute x @ w
        return jax.random.normal(next(keys), (in_dim, out_dim), jnp.float32) / math.sqrt(in_dim)

    def vec(dim, base=0.0):
        return base + 0.1 * jax.random.normal(next(keys), (dim,), jnp.float32)

    def bn_params(dim):
        return vec(dim, 1.0), vec(dim, 0.0)

    enc = dict(
        wq=dense(input_dim, input_dim), bq=vec(input_dim),
        wk=dense(input_dim, input_dim), bk=vec(input_dim),
        wv=dense(input_dim, input_dim), bv=vec(input_dim),
        wo=dense(input_dim, input_dim), bo=vec(input_dim),
        ln1_g=vec(input_dim, 1.0), ln1_b=vec(input_dim),
        ln2_g=vec(input_dim, 1.0), ln2_b=vec(input_dim),
        ff_w1=dense(input_dim, dff), ff_b1=vec(dff),
        ff_w2=dense(dff, input_dim), ff_b2=vec(input_dim),
    )

    bn_g, bn_b = bn_params(input_dim)

    # shared FC layers of the feature transformers (weights shared, BNs are not)
    shared_ws = [dense(input_dim, two), dense(nd_na, two)]

    def feat_transformer_params():
        shared = []
        for ws in shared_ws:
            g, b = bn_params(two)
            shared.append(dict(w=ws, g=g, b=b))
        spec = []
        for _ in range(cfg['n_independent']):
            g, b = bn_params(two)
            spec.append(dict(w=dense(nd_na, two), g=g, b=b))
        return dict(shared=shared, spec=spec)

    steps = []
    for _ in range(cfg['n_steps']):
        g, b = bn_params(att_dim)
        steps.append(dict(feat=feat_transformer_params(),
                          att_w=dense(n_a, att_dim), att_g=g, att_b=b))

    return dict(enc=enc, bn_g=bn_g, bn_b=bn_b,
                initial_splitter=feat_transformer_params(),
                steps=steps,
                final_w=dense(n_d, cfg['output_dim']))


# ---------------------------------------------------------------------------
# demo
# ---------------------------------------------------------------------------
if __name__ == "__main__":
    cfg = dict(input_dim=32, output_dim=4, n_d=8, n_a=8, n_steps=3, gamma=1.3,
               n_independent=2, n_shared=2, virtual_batch_size=64,
               attention_dim=32,        # group_attention_matrix=None -> identity
               dim_feedforward=2048)    # nn.TransformerEncoderLayer default

    B = 256
    key = jax.random.PRNGKey(0)
    kp, kx = jax.random.split(key)
    params = _init_params(kp, cfg)
    x = jax.random.normal(kx, (B, cfg['input_dim']), dtype=jnp.float32)
    vb = cfg['virtual_batch_size']

    # tight unit checks on the three standalone kernels
    y_k = jax.block_until_ready(gbn(x, params['bn_g'], params['bn_b'], vb))
    y_r = _gbn_ref(x, params['bn_g'], params['bn_b'], vb)
    assert jnp.allclose(y_k, y_r, atol=1e-4, rtol=1e-4)

    lp = params['initial_splitter']['shared'][0]
    g_k = jax.block_until_ready(glu_layer(x, lp['w'], lp['g'], lp['b'], vb))
    g_r = _glu_layer_ref(x, lp['w'], lp['g'], lp['b'], vb)
    assert jnp.allclose(g_k, g_r, atol=1e-4, rtol=1e-4)

    sp0 = params['steps'][0]
    att0 = g_r[:, :cfg['n_a']]
    prior0 = 0.5 + jax.random.uniform(kx, (B, cfg['attention_dim']), jnp.float32)
    a_k = jax.block_until_ready(
        attentive_transformer(att0, sp0['att_w'], sp0['att_g'], sp0['att_b'], prior0, vb))
    a_r = _attentive_ref(att0, sp0['att_w'], sp0['att_g'], sp0['att_b'], prior0, vb)
    assert jnp.allclose(a_k, a_r, atol=1e-4, rtol=1e-4)

    # full TabNetNoEmbeddings forward with fused Pallas kernels vs pure-JAX reference
    out = tabnet_no_embeddings_forward(params, x, cfg, use_pallas=True)
    out = jax.block_until_ready(out)
    ref = tabnet_no_embeddings_forward(params, x, cfg, use_pallas=False)

    assert out.shape == (B, cfg['output_dim'])
    assert bool(jnp.isfinite(out).all())
    assert jnp.allclose(out, ref, atol=5e-3, rtol=5e-3), float(jnp.max(jnp.abs(out - ref)))

    print("KERNEL_OK")
</pallas_src>

<mosaic_0001>
module attributes {stable_mosaic.version = 11 : i64} {
  func.func @_gbn_kernel(%arg0: i32, %arg1: memref<128x32xf32, #tpu.memory_space<vmem>>, %arg2: memref<1x32xf32, #tpu.memory_space<vmem>>, %arg3: memref<1x32xf32, #tpu.memory_space<vmem>>, %arg4: memref<128x32xf32, #tpu.memory_space<vmem>>) attributes {dimension_semantics = [#tpu.dimension_semantics<parallel>], iteration_bounds = array<i64: 2>, scalar_prefetch = 0 : i64, scratch_operands = 0 : i64, tpu.core_type = #tpu.core_type<tc>, window_params = [{transform_indices = @transform_0, window_bounds = array<i64: 128, 32>}, {pipeline_mode = #tpu.pipeline_mode<synchronous>, transform_indices = @transform_1, window_bounds = array<i64: 1, 32>}, {pipeline_mode = #tpu.pipeline_mode<synchronous>, transform_indices = @transform_2, window_bounds = array<i64: 1, 32>}, {transform_indices = @transform_3, window_bounds = array<i64: 128, 32>}]} {
    %c0 = arith.constant 0 : index
    %c0_0 = arith.constant 0 : index
    %0 = vector.load %arg2[%c0, %c0_0] : memref<1x32xf32, #tpu.memory_space<vmem>>, vector<1x32xf32>
    %c0_1 = arith.constant 0 : index
    %c0_2 = arith.constant 0 : index
    %1 = vector.load %arg3[%c0_1, %c0_2] : memref<1x32xf32, #tpu.memory_space<vmem>>, vector<1x32xf32>
    %c0_3 = arith.constant 0 : index
    %c0_4 = arith.constant 0 : index
    %2 = vector.load %arg1[%c0_3, %c0_4] : memref<128x32xf32, #tpu.memory_space<vmem>>, vector<64x32xf32>
    %cst = arith.constant dense<0.000000e+00> : vector<32xf32>
    %3 = vector.multi_reduction <add>, %2, %cst [0] : vector<64x32xf32> to vector<32xf32>
    %4 = vector.shape_cast %3 : vector<32xf32> to vector<1x32xf32>
    %cst_5 = arith.constant 6.400000e+01 : f32
    %5 = vector.broadcast %cst_5 : f32 to vector<1x32xf32>
    %6 = arith.divf %4, %5 : vector<1x32xf32>
    %7 = vector.broadcast %6 : vector<1x32xf32> to vector<64x32xf32>
    %8 = arith.subf %2, %7 : vector<64x32xf32>
    %9 = arith.mulf %8, %8 : vector<64x32xf32>
    %cst_6 = arith.constant dense<0.000000e+00> : vector<32xf32>
    %10 = vector.multi_reduction <add>, %9, %cst_6 [0] : vector<64x32xf32> to vector<32xf32>
    %11 = vector.shape_cast %10 : vector<32xf32> to vector<1x32xf32>
    %cst_7 = arith.constant 6.400000e+01 : f32
    %12 = vector.broadcast %cst_7 : f32 to vector<1x32xf32>
    %13 = arith.divf %11, %12 : vector<1x32xf32>
    %cst_8 = arith.constant 9.99999974E-6 : f32
    %14 = vector.broadcast %cst_8 : f32 to vector<1x32xf32>
    %15 = arith.addf %13, %14 : vector<1x32xf32>
    %16 = math.rsqrt %15 : vector<1x32xf32>
    %17 = arith.mulf %0, %16 : vector<1x32xf32>
    %18 = arith.mulf %6, %17 : vector<1x32xf32>
    %19 = arith.subf %1, %18 : vector<1x32xf32>
    %20 = vector.broadcast %17 : vector<1x32xf32> to vector<64x32xf32>
    %21 = arith.mulf %2, %20 : vector<64x32xf32>
    %22 = vector.broadcast %19 : vector<1x32xf32> to vector<64x32xf32>
    %23 = arith.addf %21, %22 : vector<64x32xf32>
    %c0_9 = arith.constant 0 : index
    %c0_10 = arith.constant 0 : index
    %24 = vector.load %arg4[%c0_9, %c0_10] : memref<128x32xf32, #tpu.memory_space<vmem>>, vector<64x32xf32>
    tpu.vector_store %arg4[%c0_9, %c0_10], %23 {strides = array<i32>} : memref<128x32xf32, #tpu.memory_space<vmem>>, vector<64x32xf32>,
    %c64 = arith.constant 64 : index
    %c0_11 = arith.constant 0 : index
    %25 = vector.load %arg1[%c64, %c0_11] : memref<128x32xf32, #tpu.memory_space<vmem>>, vector<64x32xf32>
    %cst_12 = arith.constant dense<0.000000e+00> : vector<32xf32>
    %26 = vector.multi_reduction <add>, %25, %cst_12 [0] : vector<64x32xf32> to vector<32xf32>
    %27 = vector.shape_cast %26 : vector<32xf32> to vector<1x32xf32>
    %cst_13 = arith.constant 6.400000e+01 : f32
    %28 = vector.broadcast %cst_13 : f32 to vector<1x32xf32>
    %29 = arith.divf %27, %28 : vector<1x32xf32>
    %30 = vector.broadcast %29 : vector<1x32xf32> to vector<64x32xf32>
    %31 = arith.subf %25, %30 : vector<64x32xf32>
    %32 = arith.mulf %31, %31 : vector<64x32xf32>
    %cst_14 = arith.constant dense<0.000000e+00> : vector<32xf32>
    %33 = vector.multi_reduction <add>, %32, %cst_14 [0] : vector<64x32xf32> to vector<32xf32>
    %34 = vector.shape_cast %33 : vector<32xf32> to vector<1x32xf32>
    %cst_15 = arith.constant 6.400000e+01 : f32
    %35 = vector.broadcast %cst_15 : f32 to vector<1x32xf32>
    %36 = arith.divf %34, %35 : vector<1x32xf32>
    %cst_16 = arith.constant 9.99999974E-6 : f32
    %37 = vector.broadcast %cst_16 : f32 to vector<1x32xf32>
    %38 = arith.addf %36, %37 : vector<1x32xf32>
    %39 = math.rsqrt %38 : vector<1x32xf32>
    %40 = arith.mulf %0, %39 : vector<1x32xf32>
    %41 = arith.mulf %29, %40 : vector<1x32xf32>
    %42 = arith.subf %1, %41 : vector<1x32xf32>
    %43 = vector.broadcast %40 : vector<1x32xf32> to vector<64x32xf32>
    %44 = arith.mulf %25, %43 : vector<64x32xf32>
    %45 = vector.broadcast %42 : vector<1x32xf32> to vector<64x32xf32>
    %46 = arith.addf %44, %45 : vector<64x32xf32>
    %c64_17 = arith.constant 64 : index
    %c0_18 = arith.constant 0 : index
    %47 = vector.load %arg4[%c64_17, %c0_18] : memref<128x32xf32, #tpu.memory_space<vmem>>, vector<64x32xf32>
    tpu.vector_store %arg4[%c64_17, %c0_18], %46 {strides = array<i32>} : memref<128x32xf32, #tpu.memory_space<vmem>>, vector<64x32xf32>,
    return
  }
  func.func @transform_0(%arg0: i32) -> (i32, i32) {
    %c0_i32 = arith.constant 0 : i32
    %c0_i32_0 = arith.constant 0 : i32
    return %arg0, %c0_i32 : i32, i32
  }
  func.func @transform_1(%arg0: i32) -> (i32, i32) {
    %c0_i32 = arith.constant 0 : i32
    %c0_i32_0 = arith.constant 0 : i32
    %c0_i32_1 = arith.constant 0 : i32
    return %c0_i32, %c0_i32_0 : i32, i32
  }
  func.func @transform_2(%arg0: i32) -> (i32, i32) {
    %c0_i32 = arith.constant 0 : i32
    %c0_i32_0 = arith.constant 0 : i32
    %c0_i32_1 = arith.constant 0 : i32
    return %c0_i32, %c0_i32_0 : i32, i32
  }
  func.func @transform_3(%arg0: i32) -> (i32, i32) {
    %c0_i32 = arith.constant 0 : i32
    %c0_i32_0 = arith.constant 0 : i32
    return %arg0, %c0_i32 : i32, i32
  }
}

</mosaic_0001>

<llo_original>
// kernel: tpu_custom_call.1
$region0: #{tpu_custom_call.1}
  #allocation0 [shape = 'u32[]', space=smem, size = 0x4, offset = 0x4, fixed_abs, tag = 'smem constant byte address 0x4 - core index']
  #allocation1 [shape = 'u32[72,128]{1,0:T(1,128)}', space=vmem, size = 0x9000, scoped, tag = 'internal scratch']
  %s0 = inlined_call_operand.vmem [shape: f32[256,32], index: 0, kind: input, shape index: {}]
  %s1 = inlined_call_operand.vmem [shape: f32[1,32], index: 1, kind: input, shape index: {}]
  %s2 = inlined_call_operand.vmem [shape: f32[1,32], index: 2, kind: input, shape index: {}]
  %s3 = inlined_call_operand.vmem [shape: f32[256,32], index: 3, kind: output, shape index: {}]
  %s4 = sld [smem:[#allocation0]]
  $region45: #{tpu_custom_call.1} parent=0
    _
  %s6 = ssub.s32 1, %s4
  %s7 = scalar_select 0, %s6, %s4
  loop: start=0, step=1, limit=4
  $region2: #{tpu_custom_call.1} parent=0 // loop_pre_header
    _
  $region3: #{tpu_custom_call.1} parent=0 // loop_header
    %s9 = sphi 0, %s13
    %p10 = scmp.ge.s32.totalorder %s9, 4
    %s19 = sphi 0, %s21
    %s22 = sphi 0, %s19
    %s23 = sphi 0, %s22
    %s39 = sphi 0, %s23
    %s43 = sphi 0, %s43
    %s45 = sphi 0, %s43
    %s46 = sphi 0, %s45
    %s60 = sphi 0, %s46
    %s64 = sphi 0, %s64
    %s66 = sphi 0, %s64
    %s67 = sphi 0, %s66
    %s81 = sphi 0, %s67
    %s87 = sphi 0, %s89
    %s90 = sphi 0, %s87
    %s91 = sphi 0, %s90
    %s107 = sphi 0, %s91
  $region4: #{tpu_custom_call.1} parent=0 // loop_header_branch
    %12 = sbr.rel (%p10) target = $region8
  $region5: #{tpu_custom_call.1} parent=0 // loop_body
    %s14 = ssub.s32 %s9, 1
    %s15 = ssub.s32 %s9, 2
    %s16 = sadd.s32 %s9, 1
    %s17 = ssub.s32 %s9, %s16
    %p18 = scmp.eq.s32.totalorder %s17, 0
    %s20 = sadd.s32 %s19, 1
    %s21 = scalar_select %p18, %s19, %s20
    %p24 = pneg %p18
    %p25 = scmp.eq.s32.totalorder %s9, 1
    %p26 = por %p24, %p25
    %p27 = scmp.ne.s32.totalorder %s19, %s22
    %p28 = scmp.eq.s32.totalorder %s9, 0
    %p29 = por %p27, %p28
    %p30 = scmp.ne.s32.totalorder %s19, %s22
    %p31 = scmp.eq.s32.totalorder %s14, 1
    %p32 = por %p30, %p31
    %p33 = scmp.ne.s32.totalorder %s22, %s23
    %p34 = scmp.eq.s32.totalorder %s14, 0
    %p35 = por %p33, %p34
    %p36 = scmp.ne.s32.totalorder %s22, %s23
    %p37 = scmp.eq.s32.totalorder %s15, 1
    %p38 = por %p36, %p37
    %p40 = scmp.ne.s32.totalorder %s23, %s39
    %p41 = scmp.eq.s32.totalorder %s15, 0
    %p42 = por %p40, %p41
    %s44 = sadd.s32 %s43, 1
    %p47 = scmp.eq.s32.totalorder %s9, 1
    %p48 = scmp.ne.s32.totalorder %s43, %s45
    %p49 = scmp.eq.s32.totalorder %s9, 0
    %p50 = por %p48, %p49
    %p51 = scmp.ne.s32.totalorder %s43, %s45
    %p52 = scmp.eq.s32.totalorder %s14, 1
    %p53 = por %p51, %p52
    %p54 = scmp.ne.s32.totalorder %s45, %s46
    %p55 = scmp.eq.s32.totalorder %s14, 0
    %p56 = por %p54, %p55
    %p57 = scmp.ne.s32.totalorder %s45, %s46
    %p58 = scmp.eq.s32.totalorder %s15, 1
    %p59 = por %p57, %p58
    %p61 = scmp.ne.s32.totalorder %s46, %s60
    %p62 = scmp.eq.s32.totalorder %s15, 0
    %p63 = por %p61, %p62
    %s65 = sadd.s32 %s64, 1
    %p68 = scmp.eq.s32.totalorder %s9, 1
    %p69 = scmp.ne.s32.totalorder %s64, %s66
    %p70 = scmp.eq.s32.totalorder %s9, 0
    %p71 = por %p69, %p70
    %p72 = scmp.ne.s32.totalorder %s64, %s66
    %p73 = scmp.eq.s32.totalorder %s14, 1
    %p74 = por %p72, %p73
    %p75 = scmp.ne.s32.totalorder %s66, %s67
    %p76 = scmp.eq.s32.totalorder %s14, 0
    %p77 = por %p75, %p76
    %p78 = scmp.ne.s32.totalorder %s66, %s67
    %p79 = scmp.eq.s32.totalorder %s15, 1
    %p80 = por %p78, %p79
    %p82 = scmp.ne.s32.totalorder %s67, %s81
    %p83 = scmp.eq.s32.totalorder %s15, 0
    %p84 = por %p82, %p83
    %s85 = ssub.s32 %s9, %s16
    %p86 = scmp.eq.s32.totalorder %s85, 0
    %s88 = sadd.s32 %s87, 1
    %s89 = scalar_select %p86, %s87, %s88
    %p92 = pneg %p86
    %p93 = scmp.eq.s32.totalorder %s9, 1
    %p94 = por %p92, %p93
    %p95 = scmp.ne.s32.totalorder %s87, %s90
    %p96 = scmp.eq.s32.totalorder %s9, 0
    %p97 = por %p95, %p96
    %p98 = scmp.ne.s32.totalorder %s87, %s90
    %p99 = scmp.eq.s32.totalorder %s14, 1
    %p100 = por %p98, %p99
    %p101 = scmp.ne.s32.totalorder %s90, %s91
    %p102 = scmp.eq.s32.totalorder %s14, 0
    %p103 = por %p101, %p102
    %p104 = scmp.ne.s32.totalorder %s90, %s91
    %p105 = scmp.eq.s32.totalorder %s15, 1
    %p106 = por %p104, %p105
    %p108 = scmp.ne.s32.totalorder %s91, %s107
    %p109 = scmp.eq.s32.totalorder %s15, 0
    %p110 = por %p108, %p109
    %p111 = scmp.le.s32.totalorder 1, %s9
    %p112 = scmp.lt.s32.totalorder %s9, 3
    %p113 = pnand %p111, %p112
    %p114 = pneg %p113
    // Predicated region
    $region9: #{tpu_custom_call.1} parent=5 // pred_check
      _
    $region10: #{tpu_custom_call.1} parent=5 // pred_check_branch
      %116 = sbr.rel (%p113) target = $region12
    $region11: #{tpu_custom_call.1} parent=5 // pred_region
      %s117 = ssub.s32 %s9, 1
      // Predicated region
      $region13: #{tpu_custom_call.1} parent=11 // pred_check
        %p118 = pneg %p56
      $region14: #{tpu_custom_call.1} parent=11 // pred_check_branch
        %120 = sbr.rel (%p118) target = $region16
      $region15: #{tpu_custom_call.1} parent=11 // pred_region
        _
      $region16: #{tpu_custom_call.1} parent=11 // pred_fallthru
        _
      // Predicated region
      $region17: #{tpu_custom_call.1} parent=11 // pred_check
        %p121 = pneg %p77
      $region18: #{tpu_custom_call.1} parent=11 // pred_check_branch
        %123 = sbr.rel (%p121) target = $region20
      $region19: #{tpu_custom_call.1} parent=11 // pred_region
        _
      $region20: #{tpu_custom_call.1} parent=11 // pred_fallthru
        _
    $region12: #{tpu_custom_call.1} parent=5 // pred_fallthru
      _
    %p124 = scmp.lt.s32.totalorder %s9, 2
    // Predicated region
    $region21: #{tpu_custom_call.1} parent=5 // pred_check
      %p125 = pneg %p124
    $region22: #{tpu_custom_call.1} parent=5 // pred_check_branch
      %127 = sbr.rel (%p125) target = $region24
    $region23: #{tpu_custom_call.1} parent=5 // pred_region
      // Predicated region
      $region25: #{tpu_custom_call.1} parent=23 // pred_check
        %p128 = pneg %p29
      $region26: #{tpu_custom_call.1} parent=23 // pred_check_branch
        %130 = sbr.rel (%p128) target = $region28
      $region27: #{tpu_custom_call.1} parent=23 // pred_region
        %s131 = smul.u32 16, %s9
        %p132 = scmp.lt.s32.totalorder %s131, 31
        %s133 = scalar_select %p132, %s131, 31
        %s134 = smul.addr %s133, 8
        %s135 = scalar_lea.vmem %s0, %s134
        %s136 = smul.u32 16, %s9
      $region28: #{tpu_custom_call.1} parent=23 // pred_fallthru
        _
    $region24: #{tpu_custom_call.1} parent=5 // pred_fallthru
      _
    %p137 = scmp.le.s32.totalorder 1, %s9
    %p138 = scmp.lt.s32.totalorder %s9, 3
    %p139 = pnand %p137, %p138
    %p140 = pneg %p139
    // Predicated region
    $region29: #{tpu_custom_call.1} parent=5 // pred_check
      _
    $region30: #{tpu_custom_call.1} parent=5 // pred_check_branch
      %142 = sbr.rel (%p139) target = $region32
    $region31: #{tpu_custom_call.1} parent=5 // pred_region
      %s143 = ssub.s32 %s9, 1
      %s144 = smul.u32 16, %s14
      %p145 = scmp.lt.s32.totalorder %s144, 31
      %s146 = scalar_select %p145, %s144, 31
      %s147 = smul.addr %s146, 8
      %s148 = scalar_lea.vmem %s0, %s147
      %p149 = pneg %p35
      %p150 = pneg %p32
      %p151 = pneg %p56
      %p152 = pneg %p53
      %p153 = pneg %p77
      %p154 = pneg %p74
      %p155 = pneg %p103
      %p156 = pneg %p100
      %s157 = smul.u32 16, %s14
      %p158 = scmp.lt.s32.totalorder %s157, 31
      %s159 = scalar_select %p158, %s157, 31
      %s160 = smul.addr %s159, 8
      %s161 = scalar_lea.vmem %s3, %s160
      %s162 = smul.u32 16, %s14
      %p163 = scmp.lt.s32.totalorder %s162, 31
      %s164 = scalar_select %p163, %s162, 31
      %s165 = smul.addr %s164, 8
      %s166 = scalar_lea.vmem %s0, %s165
      %s167 = smul.u32 16, %s14
      %s168 = smul.u32 16, %s14
      %p169 = scmp.lt.s32.totalorder %s168, 31
      %s170 = scalar_select %p169, %s168, 31
      %s171 = smul.addr %s170, 8
      %s172 = scalar_lea.vmem %s3, %s171
      %s173 = smul.u32 16, %s14
      %v174 = vld [vmem:[%s1] sm:$0x1]
      %v175 = vld [vmem:[%s2] sm:$0x1]
      %v176 = vld [vmem:[%s166] sm:$0xff]
      %v177 = vld [vmem:[%s166 + $0x8] sm:$0xff]
      %v178 = vld [vmem:[%s166 + $0x10] sm:$0xff]
      %v179 = vld [vmem:[%s166 + $0x18] sm:$0xff]
      %v180 = vld [vmem:[%s166 + $0x20] sm:$0xff]
      %v181 = vld [vmem:[%s166 + $0x28] sm:$0xff]
      %v182 = vld [vmem:[%s166 + $0x30] sm:$0xff]
      %v183 = vld [vmem:[%s166 + $0x38] sm:$0xff]
      %vm184 = vcmask 261120
      %v185 = vsel %vm184, %v176, 0.0
      %v186 = vsel %vm184, %v177, 0.0
      %v187 = vadd.f32 %v185, %v186
      %v188 = vsel %vm184, %v178, 0.0
      %v189 = vadd.f32 %v187, %v188
      %v190 = vsel %vm184, %v179, 0.0
      %v191 = vadd.f32 %v189, %v190
      %v192 = vsel %vm184, %v180, 0.0
      %v193 = vadd.f32 %v191, %v192
      %v194 = vsel %vm184, %v181, 0.0
      %v195 = vadd.f32 %v193, %v194
      %v196 = vsel %vm184, %v182, 0.0
      %v197 = vadd.f32 %v195, %v196
      %v198 = vsel %vm184, %v183, 0.0
      %v199 = vadd.f32 %v197, %v198
      %v200 = vrot.slane %v199, 4
      %v201 = vadd.f32 %v199, %v200
      %v202 = vrot.slane %v201, 2
      %v203 = vadd.f32 %v201, %v202
      %v204 = vrot.slane %v203, 1
      %v205 = vadd.f32 %v203, %v204
      %v206 = vrcp.pop 64.0
      %v207 = vmul.f32 64.0, %v206
      %v208 = vsub.f32 1.0, %v207
      %v209 = vmul.f32 %v206, %v208
      %v210 = vadd.f32 %v206, %v209
      %vm211 = vweird.f32 %v206
      %v212 = vsel %vm211, %v206, %v210
      %v213 = vmul.f32 %v205, %v212
      %v214 = vsub.f32 %v176, %v213
      %v215 = vsub.f32 %v177, %v213
      %v216 = vsub.f32 %v178, %v213
      %v217 = vsub.f32 %v179, %v213
      %v218 = vsub.f32 %v180, %v213
      %v219 = vsub.f32 %v181, %v213
      %v220 = vsub.f32 %v182, %v213
      %v221 = vsub.f32 %v183, %v213
      %v222 = vmul.f32 %v214, %v214
      %v223 = vmul.f32 %v215, %v215
      %v224 = vmul.f32 %v216, %v216
      %v225 = vmul.f32 %v217, %v217
      %v226 = vmul.f32 %v218, %v218
      %v227 = vmul.f32 %v219, %v219
      %v228 = vmul.f32 %v220, %v220
      %v229 = vmul.f32 %v221, %v221
      %v230 = vsel %vm184, %v222, 0.0
      %v231 = vsel %vm184, %v223, 0.0
      %v232 = vadd.f32 %v230, %v231
      %v233 = vsel %vm184, %v224, 0.0
      %v234 = vadd.f32 %v232, %v233
      %v235 = vsel %vm184, %v225, 0.0
      %v236 = vadd.f32 %v234, %v235
      %v237 = vsel %vm184, %v226, 0.0
      %v238 = vadd.f32 %v236, %v237
      %v239 = vsel %vm184, %v227, 0.0
      %v240 = vadd.f32 %v238, %v239
      %v241 = vsel %vm184, %v228, 0.0
      %v242 = vadd.f32 %v240, %v241
      %v243 = vsel %vm184, %v229, 0.0
      %v244 = vadd.f32 %v242, %v243
      %v245 = vrot.slane %v244, 4
      %v246 = vadd.f32 %v244, %v245
      %v247 = vrot.slane %v246, 2
      %v248 = vadd.f32 %v246, %v247
      %v249 = vrot.slane %v248, 1
      %v250 = vadd.f32 %v248, %v249
      %v251 = vmul.f32 %v250, %v212
      %v252 = vadd.f32 %v251, 1e-05
      %v253 = vrsqrt.pop %v252
      %v254 = vmul.f32 %v253, %v252
      %v255 = vmul.f32 %v254, %v253
      %v256 = vmul.f32 0.5, %v255
      %v257 = vsub.f32 1.5, %v256
      %v258 = vmul.f32 %v253, %v257
      %vm259 = vweird.f32 %v252
      %vm260 = vweird.f32 %v253
      %vm261 = vmor %vm259, %vm260
      %v262 = vsel %vm261, %v253, %v258
      %v263 = vmul.f32 %v174, %v262
      %v264 = vmul.f32 %v213, %v263
      %v265 = vsub.f32 %v175, %v264
      %v267 = vperm.slane %v263, 0
      %v269 = vmul.f32 %v176, %v267
      %v270 = vmul.f32 %v177, %v267
      %v271 = vmul.f32 %v178, %v267
      %v272 = vmul.f32 %v179, %v267
      %v273 = vmul.f32 %v180, %v267
      %v274 = vmul.f32 %v181, %v267
      %v275 = vmul.f32 %v182, %v267
      %v276 = vmul.f32 %v183, %v267
      %v278 = vperm.slane %v265, 0
      %v280 = vadd.f32 %v269, %v278
      %v281 = vadd.f32 %v270, %v278
      %v282 = vadd.f32 %v271, %v278
      %v283 = vadd.f32 %v272, %v278
      %v284 = vadd.f32 %v273, %v278
      %v285 = vadd.f32 %v274, %v278
      %v286 = vadd.f32 %v275, %v278
      %v287 = vadd.f32 %v276, %v278
      %288 = vst.msk [vmem:[%s172] sm:$0xff] %vm184, %v280
      %289 = vst.msk [vmem:[%s172 + $0x8] sm:$0xff] %vm184, %v281
      %290 = vst.msk [vmem:[%s172 + $0x10] sm:$0xff] %vm184, %v282
      %291 = vst.msk [vmem:[%s172 + $0x18] sm:$0xff] %vm184, %v283
      %292 = vst.msk [vmem:[%s172 + $0x20] sm:$0xff] %vm184, %v284
      %293 = vst.msk [vmem:[%s172 + $0x28] sm:$0xff] %vm184, %v285
      %294 = vst.msk [vmem:[%s172 + $0x30] sm:$0xff] %vm184, %v286
      %295 = vst.msk [vmem:[%s172 + $0x38] sm:$0xff] %vm184, %v287
      %v296 = vld [vmem:[%s166 + $0x40] sm:$0xff]
      %v297 = vld [vmem:[%s166 + $0x48] sm:$0xff]
      %v298 = vld [vmem:[%s166 + $0x50] sm:$0xff]
      %v299 = vld [vmem:[%s166 + $0x58] sm:$0xff]
      %v300 = vld [vmem:[%s166 + $0x60] sm:$0xff]
      %v301 = vld [vmem:[%s166 + $0x68] sm:$0xff]
      %v302 = vld [vmem:[%s166 + $0x70] sm:$0xff]
      %v303 = vld [vmem:[%s166 + $0x78] sm:$0xff]
      %v304 = vsel %vm184, %v296, 0.0
      %v305 = vsel %vm184, %v297, 0.0
      %v306 = vadd.f32 %v304, %v305
      %v307 = vsel %vm184, %v298, 0.0
      %v308 = vadd.f32 %v306, %v307
      %v309 = vsel %vm184, %v299, 0.0
      %v310 = vadd.f32 %v308, %v309
      %v311 = vsel %vm184, %v300, 0.0
      %v312 = vadd.f32 %v310, %v311
      %v313 = vsel %vm184, %v301, 0.0
      %v314 = vadd.f32 %v312, %v313
      %v315 = vsel %vm184, %v302, 0.0
      %v316 = vadd.f32 %v314, %v315
      %v317 = vsel %vm184, %v303, 0.0
      %v318 = vadd.f32 %v316, %v317
      %v319 = vrot.slane %v318, 4
      %v320 = vadd.f32 %v318, %v319
      %v321 = vrot.slane %v320, 2
      %v322 = vadd.f32 %v320, %v321
      %v323 = vrot.slane %v322, 1
      %v324 = vadd.f32 %v322, %v323
      %v325 = vmul.f32 %v324, %v212
      %v326 = vsub.f32 %v296, %v325
      %v327 = vsub.f32 %v297, %v325
      %v328 = vsub.f32 %v298, %v325
      %v329 = vsub.f32 %v299, %v325
      %v330 = vsub.f32 %v300, %v325
      %v331 = vsub.f32 %v301, %v325
      %v332 = vsub.f32 %v302, %v325
      %v333 = vsub.f32 %v303, %v325
      %v334 = vmul.f32 %v326, %v326
      %v335 = vmul.f32 %v327, %v327
      %v336 = vmul.f32 %v328, %v328
      %v337 = vmul.f32 %v329, %v329
      %v338 = vmul.f32 %v330, %v330
      %v339 = vmul.f32 %v331, %v331
      %v340 = vmul.f32 %v332, %v332
      %v341 = vmul.f32 %v333, %v333
      %v342 = vsel %vm184, %v334, 0.0
      %v343 = vsel %vm184, %v335, 0.0
      %v344 = vadd.f32 %v342, %v343
      %v345 = vsel %vm184, %v336, 0.0
      %v346 = vadd.f32 %v344, %v345
      %v347 = vsel %vm184, %v337, 0.0
      %v348 = vadd.f32 %v346, %v347
      %v349 = vsel %vm184, %v338, 0.0
      %v350 = vadd.f32 %v348, %v349
      %v351 = vsel %vm184, %v339, 0.0
      %v352 = vadd.f32 %v350, %v351
      %v353 = vsel %vm184, %v340, 0.0
      %v354 = vadd.f32 %v352, %v353
      %v355 = vsel %vm184, %v341, 0.0
      %v356 = vadd.f32 %v354, %v355
      %v357 = vrot.slane %v356, 4
      %v358 = vadd.f32 %v356, %v357
      %v359 = vrot.slane %v358, 2
      %v360 = vadd.f32 %v358, %v359
      %v361 = vrot.slane %v360, 1
      %v362 = vadd.f32 %v360, %v361
      %v363 = vmul.f32 %v362, %v212
      %v364 = vadd.f32 %v363, 1e-05
      %v365 = vrsqrt.pop %v364
      %v366 = vmul.f32 %v365, %v364
      %v367 = vmul.f32 %v366, %v365
      %v368 = vmul.f32 0.5, %v367
      %v369 = vsub.f32 1.5, %v368
      %v370 = vmul.f32 %v365, %v369
      %vm371 = vweird.f32 %v364
      %vm372 = vweird.f32 %v365
      %vm373 = vmor %vm371, %vm372
      %v374 = vsel %vm373, %v365, %v370
      %v375 = vmul.f32 %v174, %v374
      %v376 = vmul.f32 %v325, %v375
      %v377 = vsub.f32 %v175, %v376
      %v379 = vperm.slane %v375, 0
      %v381 = vmul.f32 %v296, %v379
      %v382 = vmul.f32 %v297, %v379
      %v383 = vmul.f32 %v298, %v379
      %v384 = vmul.f32 %v299, %v379
      %v385 = vmul.f32 %v300, %v379
      %v386 = vmul.f32 %v301, %v379
      %v387 = vmul.f32 %v302, %v379
      %v388 = vmul.f32 %v303, %v379
      %v390 = vperm.slane %v377, 0
      %v392 = vadd.f32 %v381, %v390
      %v393 = vadd.f32 %v382, %v390
      %v394 = vadd.f32 %v383, %v390
      %v395 = vadd.f32 %v384, %v390
      %v396 = vadd.f32 %v385, %v390
      %v397 = vadd.f32 %v386, %v390
      %v398 = vadd.f32 %v387, %v390
      %v399 = vadd.f32 %v388, %v390
      %400 = vst.msk [vmem:[%s172 + $0x40] sm:$0xff] %vm184, %v392
      %401 = vst.msk [vmem:[%s172 + $0x48] sm:$0xff] %vm184, %v393
      %402 = vst.msk [vmem:[%s172 + $0x50] sm:$0xff] %vm184, %v394
      %403 = vst.msk [vmem:[%s172 + $0x58] sm:$0xff] %vm184, %v395
      %404 = vst.msk [vmem:[%s172 + $0x60] sm:$0xff] %vm184, %v396
      %405 = vst.msk [vmem:[%s172 + $0x68] sm:$0xff] %vm184, %v397
      %406 = vst.msk [vmem:[%s172 + $0x70] sm:$0xff] %vm184, %v398
      %407 = vst.msk [vmem:[%s172 + $0x78] sm:$0xff] %vm184, %v399
      %s408 = smul.u32 16, %s14
      %p409 = scmp.lt.s32.totalorder %s408, 31
      %s410 = scalar_select %p409, %s408, 31
      %s411 = smul.addr %s410, 8
      %s412 = scalar_lea.vmem %s3, %s411
      // Predicated region
      $region33: #{tpu_custom_call.1} parent=31 // pred_check
        %p413 = pneg %p100
      $region34: #{tpu_custom_call.1} parent=31 // pred_check_branch
        %415 = sbr.rel (%p413) target = $region36
      $region35: #{tpu_custom_call.1} parent=31 // pred_region
        %s416 = smul.u32 16, %s14
      $region36: #{tpu_custom_call.1} parent=31 // pred_fallthru
        _
    $region32: #{tpu_custom_call.1} parent=5 // pred_fallthru
      _
    %p417 = scmp.le.s32.totalorder 2, %s9
    // Predicated region
    $region37: #{tpu_custom_call.1} parent=5 // pred_check
      %p418 = pneg %p417
    $region38: #{tpu_custom_call.1} parent=5 // pred_check_branch
      %420 = sbr.rel (%p418) target = $region40
    $region39: #{tpu_custom_call.1} parent=5 // pred_region
      %s421 = ssub.s32 %s9, 2
      // Predicated region
      $region41: #{tpu_custom_call.1} parent=39 // pred_check
        %p422 = pneg %p106
      $region42: #{tpu_custom_call.1} parent=39 // pred_check_branch
        %424 = sbr.rel (%p422) target = $region44
      $region43: #{tpu_custom_call.1} parent=39 // pred_region
        %s425 = smul.u32 16, %s15
        %p426 = scmp.lt.s32.totalorder %s425, 31
        %s427 = scalar_select %p426, %s425, 31
        %s428 = smul.addr %s427, 8
        %s429 = scalar_lea.vmem %s3, %s428
      $region44: #{tpu_custom_call.1} parent=39 // pred_fallthru
        _
    $region40: #{tpu_custom_call.1} parent=5 // pred_fallthru
      _
  $region6: #{tpu_custom_call.1} parent=0 // loop_footer
    %s13 = sadd.s32 1, %s9
  $region7: #{tpu_custom_call.1} parent=0 // loop_footer_branch
    %8 = sbr.rel target = $region3
  $region8: #{tpu_custom_call.1} parent=0 // loop_exit
    _

</llo_original>
